<compile_context>
chip_gen: v7x
topology: tpu7x:2x2x1
jax: 0.10.0
libtpu: 0.0.40
codegen_flags: <defaults>
</compile_context>

<pallas_src>
import jax
import jax.numpy as jnp
from jax import lax
from jax.experimental import pallas as pl
from jax.experimental.pallas import tpu as pltpu

_BN_EPS = 1e-5
_VMEM_LIMIT = 32 * 1024 * 1024   # explicit scoped-VMEM budget (raises v5e's 16 MiB default,
                                 # safe on v7x's 64 MiB physical)
_MAX_TILE = 2048                 # lane-tile cap (columns)


def _round_up(x, m):
    return ((x + m - 1) // m) * m


def _pick_tile(mp, cap=_MAX_TILE):
    """Largest multiple-of-128 divisor of mp, capped."""
    best = 128
    d = 128
    while d <= min(mp, cap):
        if mp % d == 0:
            best = d
        d += 128
    return best


# ----------------------------------------------------------------------------
# Pallas kernels
# ----------------------------------------------------------------------------
def _conv_stats_body(a_bf16, w_ref, z_ref, s1_ref, s2_ref):
    # 1x1 conv == channel matmul on the MXU (bf16 in, f32 accumulate).
    z = jnp.dot(w_ref[...], a_bf16, preferred_element_type=jnp.float32)   # [Cout, tile]
    z_ref[...] = z

    @pl.when(pl.program_id(0) == 0)
    def _():
        s1_ref[...] = jnp.zeros_like(s1_ref)
        s2_ref[...] = jnp.zeros_like(s2_ref)

    # One-pass BN statistics: accumulate sum and sum-of-squares per channel.
    s1_ref[...] += jnp.sum(z, axis=1, keepdims=True)
    s2_ref[...] += jnp.sum(z * z, axis=1, keepdims=True)


def _conv_stats_kernel_first(x_ref, w_ref, z_ref, s1_ref, s2_ref):
    # First layer: raw grouped features (already zero-padded), no previous BN/ReLU.
    _conv_stats_body(x_ref[...].astype(jnp.bfloat16), w_ref, z_ref, s1_ref, s2_ref)


def _conv_stats_kernel_bn(x_ref, sc_ref, sh_ref, mk_ref, w_ref, z_ref, s1_ref, s2_ref):
    # Apply previous layer's folded BN (single FMA) + ReLU, mask padded columns so
    # they stay exactly zero (keeps the global statistics exact), then conv.
    a = jnp.maximum(x_ref[...] * sc_ref[...] + sh_ref[...], 0.0) * mk_ref[...]
    _conv_stats_body(a.astype(jnp.bfloat16), w_ref, z_ref, s1_ref, s2_ref)


def _bn_relu_maxk_kernel(z_ref, sc_ref, sh_ref, o_ref, acc_ref):
    # Final pass: last layer's BN (folded) + ReLU, max over the K neighbor axis
    # (K is the second grid axis; accumulator lives in VMEM scratch).
    k = pl.program_id(1)
    v = jnp.maximum(z_ref[...] * sc_ref[...] + sh_ref[...], 0.0)

    @pl.when(k == 0)
    def _():
        acc_ref[...] = v

    @pl.when(k > 0)
    def _():
        acc_ref[...] = jnp.maximum(acc_ref[...], v)

    @pl.when(k == pl.num_programs(1) - 1)
    def _():
        o_ref[...] = acc_ref[...]


# ----------------------------------------------------------------------------
# pallas_call wrappers
# ----------------------------------------------------------------------------
def _conv_bn_stats(x, wt_bf16, scale, shift, mask, *, tile):
    """x: [Cin, R] f32; wt_bf16: [Cout, Cin]; returns (z [Cout,R] f32, sum, sumsq)."""
    cin, r = x.shape
    cout = wt_bf16.shape[0]
    grid = (r // tile,)
    first = scale is None

    x_spec = pl.BlockSpec((cin, tile), lambda i: (0, i))
    w_spec = pl.BlockSpec((cout, cin), lambda i: (0, 0))
    if first:
        kernel = _conv_stats_kernel_first
        in_specs = [x_spec, w_spec]
        args = (x, wt_bf16)
    else:
        kernel = _conv_stats_kernel_bn
        in_specs = [x_spec,
                    pl.BlockSpec((cin, 1), lambda i: (0, 0)),
                    pl.BlockSpec((cin, 1), lambda i: (0, 0)),
                    pl.BlockSpec((1, tile), lambda i: (0, i)),
                    w_spec]
        args = (x, scale, shift, mask, wt_bf16)

    out_shape = (jax.ShapeDtypeStruct((cout, r), jnp.float32),
                 jax.ShapeDtypeStruct((cout, 1), jnp.float32),
                 jax.ShapeDtypeStruct((cout, 1), jnp.float32))
    out_specs = (pl.BlockSpec((cout, tile), lambda i: (0, i)),
                 pl.BlockSpec((cout, 1), lambda i: (0, 0)),
                 pl.BlockSpec((cout, 1), lambda i: (0, 0)))

    cost = pl.CostEstimate(
        flops=2 * cin * cout * r,
        transcendentals=0,
        bytes_accessed=int(x.size * 4 + wt_bf16.size * 2 + cout * r * 4))

    return pl.pallas_call(
        kernel,
        grid=grid,
        in_specs=in_specs,
        out_specs=out_specs,
        out_shape=out_shape,
        compiler_params=pltpu.CompilerParams(
            dimension_semantics=("arbitrary",),      # stats accumulate across tiles
            vmem_limit_bytes=_VMEM_LIMIT),
        cost_estimate=cost,
    )(*args)


def _bn_relu_maxk(z, scale, shift, k_neighbors, mp, *, tile):
    """z: [C, K*mp] f32 -> [C, mp] f32 (BN + ReLU + max over K)."""
    c, r = z.shape
    nmt = mp // tile
    grid = (nmt, k_neighbors)                        # K (reduction) axis last

    in_specs = [pl.BlockSpec((c, tile), lambda i, k: (0, k * nmt + i)),
                pl.BlockSpec((c, 1), lambda i, k: (0, 0)),
                pl.BlockSpec((c, 1), lambda i, k: (0, 0))]
    out_specs = pl.BlockSpec((c, tile), lambda i, k: (0, i))
    cost = pl.CostEstimate(flops=3 * c * r, transcendentals=0,
                           bytes_accessed=int(c * r * 4 + c * mp * 4))

    return pl.pallas_call(
        _bn_relu_maxk_kernel,
        grid=grid,
        in_specs=in_specs,
        out_specs=out_specs,
        out_shape=jax.ShapeDtypeStruct((c, mp), jnp.float32),
        scratch_shapes=[pltpu.VMEM((c, tile), jnp.float32)],
        compiler_params=pltpu.CompilerParams(
            dimension_semantics=("parallel", "arbitrary"),   # M-tiles shard on v7x's 2 TCs
            vmem_limit_bytes=_VMEM_LIMIT),
        cost_estimate=cost,
    )(z, scale, shift)


def _bn_fold(s1, s2, count, gamma, beta, eps=_BN_EPS):
    """Fold training-mode BN stats into a single scale/shift FMA (tiny, plain JAX)."""
    mean = s1[:, 0] / count
    var = jnp.maximum(s2[:, 0] / count - mean * mean, 0.0)
    scale = gamma * lax.rsqrt(var + eps)
    shift = beta - mean * scale
    return scale[:, None], shift[:, None]


def msg_block(grouped, layer_params):
    """grouped: [B, S, K, C] f32; returns [B, C_last, S] f32."""
    b, s, k, c = grouped.shape
    m = b * s
    mp = _round_up(m, 128)           # lane-dense padding of the B*S axis
    tile = _pick_tile(mp)
    r = k * mp

    # Channels-first slab [C, K*mp]; column r = k*mp + (b*S + s); zero-pad the tail.
    x = jnp.transpose(grouped, (3, 2, 0, 1)).reshape(c, k, m).astype(jnp.float32)
    x = jnp.pad(x, ((0, 0), (0, 0), (0, mp - m))).reshape(c, r)
    mask = jnp.tile((jnp.arange(mp) < m).astype(jnp.float32), k).reshape(1, r)
    count = float(b * s * k)         # BatchNorm2d train-mode stats over (B, S, K)

    scale = shift = None
    z = x
    for (w, _bias, gamma, beta) in layer_params:
        # Conv bias is dropped: it cancels exactly under training-mode BN.
        wt = jnp.transpose(w).astype(jnp.bfloat16)   # [Cout, Cin] for W^T @ x on MXU
        z, s1, s2 = _conv_bn_stats(z, wt, scale, shift, mask, tile=tile)
        scale, shift = _bn_fold(s1, s2, count, gamma, beta)

    out = _bn_relu_maxk(z, scale, shift, k, mp, tile=tile)   # [C_last, mp]
    out = out[:, :m].reshape(-1, b, s)                        # [C_last, B, S]
    return jnp.transpose(out, (1, 0, 2))                      # [B, C_last, S]


# ----------------------------------------------------------------------------
# Plain-JAX glue: FPS, ball query, gathers (data-dependent index plumbing)
# ----------------------------------------------------------------------------
def square_distance(src, dst):
    d = -2.0 * jnp.einsum('bnc,bmc->bnm', src, dst)
    d = d + jnp.sum(src ** 2, -1)[:, :, None]
    d = d + jnp.sum(dst ** 2, -1)[:, None, :]
    return d


def farthest_point_sample(pc, sample_num, key):
    # TODO(synk): torch version uses torch.randint for the seed point; we use a
    # deterministic jax.random draw with a fixed key.
    B, N, _ = pc.shape
    farthest = jax.random.randint(key, (B,), 0, N, dtype=jnp.int32)
    distance = jnp.full((B, N), 1e10, dtype=jnp.float32)
    centroids = jnp.zeros((B, sample_num), dtype=jnp.int32)

    def body(i, carry):
        centroids, distance, farthest = carry
        centroids = centroids.at[:, i].set(farthest)
        centroid = jnp.take_along_axis(pc, farthest[:, None, None], axis=1)  # [B,1,3]
        dist = jnp.sum((pc - centroid) ** 2, -1)
        distance = jnp.minimum(distance, dist)
        farthest = jnp.argmax(distance, -1).astype(jnp.int32)
        return centroids, distance, farthest

    centroids, _, _ = lax.fori_loop(0, sample_num, body, (centroids, distance, farthest))
    return centroids


def index_points(pc, idx):
    B = pc.shape[0]
    batch_idx = jnp.arange(B).reshape((B,) + (1,) * (idx.ndim - 1))
    return pc[batch_idx, idx]


def query_ball_point(radius, k, pc, sampled):
    B, N, _ = pc.shape
    S = sampled.shape[1]
    sqd = square_distance(sampled, pc)                                  # [B, S, N]
    group_idx = jnp.broadcast_to(jnp.arange(N, dtype=jnp.int32), (B, S, N))
    group_idx = jnp.where(sqd > radius ** 2, jnp.int32(N), group_idx)
    group_idx = jnp.sort(group_idx, axis=-1)[:, :, :k]
    group_first = jnp.broadcast_to(group_idx[:, :, :1], (B, S, k))
    group_idx = jnp.where(group_idx == N, group_first, group_idx)
    return group_idx


# ----------------------------------------------------------------------------
# MSGSA forward
# ----------------------------------------------------------------------------
def msgsa_forward(bpc, bpc_features, params, num_fps, radius_list, ks, fps_key):
    S = num_fps
    pts = jnp.transpose(bpc, (0, 2, 1))                         # [B, N, 3]
    feats = None
    if bpc_features is not None:
        feats = jnp.transpose(bpc_features, (0, 2, 1))          # [B, N, D]
    fps_idx = farthest_point_sample(pts, S, fps_key)
    fps_points = index_points(pts, fps_idx)                     # [B, S, 3]

    new_feature_list = []
    for i, (radius, k) in enumerate(zip(radius_list, ks)):
        gidx = query_ball_point(radius, k, pts, fps_points)     # [B, S, k]
        gpts = index_points(pts, gidx) - fps_points[:, :, None, :]   # [B,S,k,3]
        if feats is not None:
            gfeat = jnp.concatenate([index_points(feats, gidx), gpts], axis=-1)
        else:
            gfeat = gpts
        new_feature_list.append(msg_block(gfeat, params[i]))    # [B, C_last, S]
    new_features = jnp.concatenate(new_feature_list, axis=1)    # [B, sum C, S]
    return jnp.transpose(fps_points, (0, 2, 1)), new_features


def init_params(key, in_channel, mlp_list):
    params = []
    for mlp in mlp_list:
        layers = []
        last = in_channel
        for out_ch in mlp:
            key, k1, k2 = jax.random.split(key, 3)
            w = jax.random.normal(k1, (last, out_ch), jnp.float32) * 0.1   # conv weight [Cin,Cout]
            b = jax.random.normal(k2, (out_ch,), jnp.float32) * 0.01       # conv bias (cancels in BN)
            gamma = jnp.ones((out_ch,), jnp.float32)                       # BN weight
            beta = jnp.zeros((out_ch,), jnp.float32)                       # BN bias
            layers.append((w, b, gamma, beta))
            last = out_ch
        params.append(layers)
    return params


if __name__ == "__main__":
    key = jax.random.PRNGKey(0)
    k_pts, k_feat, k_par, k_fps = jax.random.split(key, 4)

    B, N, D = 2, 64, 4
    num_fps = 8
    radius_list = [0.3, 0.6]
    ks = [8, 16]
    in_channel = D + 3
    mlp_list = [[16, 32], [16, 32]]

    bpc = jax.random.uniform(k_pts, (B, 3, N), jnp.float32)          # xyz in [0,1)
    bpc_features = jax.random.normal(k_feat, (B, D, N), jnp.float32)
    params = init_params(k_par, in_channel, mlp_list)

    fps_points, new_features = msgsa_forward(
        bpc, bpc_features, params, num_fps, radius_list, ks, k_fps)
    jax.block_until_ready((fps_points, new_features))

    assert fps_points.shape == (B, 3, num_fps)
    assert new_features.shape == (B, sum(m[-1] for m in mlp_list), num_fps)
    assert bool(jnp.all(jnp.isfinite(new_features)))
    print("KERNEL_OK")
</pallas_src>

<mosaic_0001>
module attributes {stable_mosaic.version = 11 : i64} {
  func.func @_conv_stats_kernel_first(%arg0: i32, %arg1: memref<7x128xf32, #tpu.memory_space<vmem>>, %arg2: memref<16x7xbf16, #tpu.memory_space<vmem>>, %arg3: memref<16x128xf32, #tpu.memory_space<vmem>>, %arg4: memref<16x1xf32, #tpu.memory_space<vmem>>, %arg5: memref<16x1xf32, #tpu.memory_space<vmem>>) attributes {dimension_semantics = [#tpu.dimension_semantics<arbitrary>], iteration_bounds = array<i64: 8>, scalar_prefetch = 0 : i64, scratch_operands = 0 : i64, tpu.core_type = #tpu.core_type<tc>, window_params = [{transform_indices = @transform_0, window_bounds = array<i64: 7, 128>}, {pipeline_mode = #tpu.pipeline_mode<synchronous>, transform_indices = @transform_1, window_bounds = array<i64: 16, 7>}, {transform_indices = @transform_2, window_bounds = array<i64: 16, 128>}, {pipeline_mode = #tpu.pipeline_mode<synchronous>, transform_indices = @transform_3, window_bounds = array<i64: 16, 1>}, {pipeline_mode = #tpu.pipeline_mode<synchronous>, transform_indices = @transform_4, window_bounds = array<i64: 16, 1>}]} {
    %c0 = arith.constant 0 : index
    %c0_0 = arith.constant 0 : index
    %0 = vector.load %arg1[%c0, %c0_0] : memref<7x128xf32, #tpu.memory_space<vmem>>, vector<7x128xf32>
    %1 = arith.truncf %0 : vector<7x128xf32> to vector<7x128xbf16>
    %c0_1 = arith.constant 0 : index
    %c0_2 = arith.constant 0 : index
    %2 = vector.load %arg2[%c0_1, %c0_2] : memref<16x7xbf16, #tpu.memory_space<vmem>>, vector<16x7xbf16>
    %cst = arith.constant dense<0.000000e+00> : vector<16x128xf32>
    %3 = tpu.matmul %2, %1, %cst {dimension_numbers = #tpu.dot_dimension_numbers<[1], [0], [0], [1], [0, 0, 1, 1], [], []>} : vector<16x7xbf16>, vector<7x128xbf16>, vector<16x128xf32> -> vector<16x128xf32>
    %c0_3 = arith.constant 0 : index
    %c0_4 = arith.constant 0 : index
    %4 = vector.load %arg3[%c0_3, %c0_4] : memref<16x128xf32, #tpu.memory_space<vmem>>, vector<16x128xf32>
    tpu.vector_store %arg3[%c0_3, %c0_4], %3 {strides = array<i32>} : memref<16x128xf32, #tpu.memory_space<vmem>>, vector<16x128xf32>,
    %c0_i32 = arith.constant 0 : i32
    %5 = arith.cmpi eq, %arg0, %c0_i32 : i32
    %6 = arith.extui %5 : i1 to i32
    %c0_i32_5 = arith.constant 0 : i32
    %7 = arith.cmpi ne, %6, %c0_i32_5 : i32
    scf.if %7 {
      %cst_16 = arith.constant 0.000000e+00 : f32
      %19 = vector.broadcast %cst_16 : f32 to vector<16x1xf32>
      %c0_17 = arith.constant 0 : index
      %c0_18 = arith.constant 0 : index
      %20 = vector.load %arg4[%c0_17, %c0_18] : memref<16x1xf32, #tpu.memory_space<vmem>>, vector<16x1xf32>
      tpu.vector_store %arg4[%c0_17, %c0_18], %19 {strides = array<i32>} : memref<16x1xf32, #tpu.memory_space<vmem>>, vector<16x1xf32>,
      %cst_19 = arith.constant 0.000000e+00 : f32
      %21 = vector.broadcast %cst_19 : f32 to vector<16x1xf32>
      %c0_20 = arith.constant 0 : index
      %c0_21 = arith.constant 0 : index
      %22 = vector.load %arg5[%c0_20, %c0_21] : memref<16x1xf32, #tpu.memory_space<vmem>>, vector<16x1xf32>
      tpu.vector_store %arg5[%c0_20, %c0_21], %21 {strides = array<i32>} : memref<16x1xf32, #tpu.memory_space<vmem>>, vector<16x1xf32>,
    } else {
    }
    %c0_6 = arith.constant 0 : index
    %c0_7 = arith.constant 0 : index
    %8 = vector.load %arg4[%c0_6, %c0_7] : memref<16x1xf32, #tpu.memory_space<vmem>>, vector<16x1xf32>
    %cst_8 = arith.constant dense<0.000000e+00> : vector<16xf32>
    %9 = vector.multi_reduction <add>, %3, %cst_8 [1] : vector<16x128xf32> to vector<16xf32>
    %10 = vector.shape_cast %9 : vector<16xf32> to vector<16x1xf32>
    %11 = arith.addf %8, %10 : vector<16x1xf32>
    %c0_9 = arith.constant 0 : index
    %c0_10 = arith.constant 0 : index
    %12 = vector.load %arg4[%c0_9, %c0_10] : memref<16x1xf32, #tpu.memory_space<vmem>>, vector<16x1xf32>
    tpu.vector_store %arg4[%c0_9, %c0_10], %11 {strides = array<i32>} : memref<16x1xf32, #tpu.memory_space<vmem>>, vector<16x1xf32>,
    %c0_11 = arith.constant 0 : index
    %c0_12 = arith.constant 0 : index
    %13 = vector.load %arg5[%c0_11, %c0_12] : memref<16x1xf32, #tpu.memory_space<vmem>>, vector<16x1xf32>
    %14 = arith.mulf %3, %3 : vector<16x128xf32>
    %cst_13 = arith.constant dense<0.000000e+00> : vector<16xf32>
    %15 = vector.multi_reduction <add>, %14, %cst_13 [1] : vector<16x128xf32> to vector<16xf32>
    %16 = vector.shape_cast %15 : vector<16xf32> to vector<16x1xf32>
    %17 = arith.addf %13, %16 : vector<16x1xf32>
    %c0_14 = arith.constant 0 : index
    %c0_15 = arith.constant 0 : index
    %18 = vector.load %arg5[%c0_14, %c0_15] : memref<16x1xf32, #tpu.memory_space<vmem>>, vector<16x1xf32>
    tpu.vector_store %arg5[%c0_14, %c0_15], %17 {strides = array<i32>} : memref<16x1xf32, #tpu.memory_space<vmem>>, vector<16x1xf32>,
    return
  }
  func.func @transform_0(%arg0: i32) -> (i32, i32) {
    %c0_i32 = arith.constant 0 : i32
    %c0_i32_0 = arith.constant 0 : i32
    return %c0_i32, %arg0 : i32, i32
  }
  func.func @transform_1(%arg0: i32) -> (i32, i32) {
    %c0_i32 = arith.constant 0 : i32
    %c0_i32_0 = arith.constant 0 : i32
    %c0_i32_1 = arith.constant 0 : i32
    return %c0_i32, %c0_i32_0 : i32, i32
  }
  func.func @transform_2(%arg0: i32) -> (i32, i32) {
    %c0_i32 = arith.constant 0 : i32
    %c0_i32_0 = arith.constant 0 : i32
    return %c0_i32, %arg0 : i32, i32
  }
  func.func @transform_3(%arg0: i32) -> (i32, i32) {
    %c0_i32 = arith.constant 0 : i32
    %c0_i32_0 = arith.constant 0 : i32
    %c0_i32_1 = arith.constant 0 : i32
    return %c0_i32, %c0_i32_0 : i32, i32
  }
  func.func @transform_4(%arg0: i32) -> (i32, i32) {
    %c0_i32 = arith.constant 0 : i32
    %c0_i32_0 = arith.constant 0 : i32
    %c0_i32_1 = arith.constant 0 : i32
    return %c0_i32, %c0_i32_0 : i32, i32
  }
}

</mosaic_0001>

<llo_original>
// kernel: tpu_custom_call.1
$region0: #{tpu_custom_call.1}
  #allocation0 [shape = 'u32[]', space=smem, size = 0x4, offset = 0x4, fixed_abs, tag = 'smem constant byte address 0x4 - core index']
  #allocation1 [shape = 'u32[144,128]{1,0:T(1,128)}', space=vmem, size = 0x12000, scoped, tag = 'internal scratch']
  %s0 = inlined_call_operand.hbm [shape: f32[7,1024], index: 0, kind: input, shape index: {}]
  %s1 = inlined_call_operand.vmem [shape: bf16[16,7], index: 1, kind: input, shape index: {}]
  %s2 = inlined_call_operand.hbm [shape: f32[16,1024], index: 2, kind: output, shape index: {0}]
  %s3 = inlined_call_operand.vmem [shape: f32[16,1], index: 3, kind: output, shape index: {1}]
  %s4 = inlined_call_operand.vmem [shape: f32[16,1], index: 4, kind: output, shape index: {2}]
  %5 = xla_tuple %s2, %s3, %s4
  %s6 = sld [smem:[#allocation0]]
  $region65: #{tpu_custom_call.1} parent=0
    _
  %s8 = ssub.s32 1, %s6
  %s9 = scalar_select 0, %s8, %s6
  $region1: #{tpu_custom_call.1} parent=0
    #allocation2 [shape = 'u8[8192]{0}', space=vmem, size = 0x2000, scoped, tag = 'input window, operand 0']
    #allocation3 [shape = 's32[2]{0}', space=sflag, size = 0x8, scoped, tag = 'scoped memory for tpu_custom_call.1']
    #allocation4 [shape = 's32[2]{0}', space=sflag, size = 0x8, scoped, tag = 'scoped memory for tpu_custom_call.1']
    #allocation5 [shape = 'u8[16384]{0}', space=vmem, size = 0x4000, scoped, tag = 'output window, operand 0']
    %10 = vsyncpa [#allocation3], 0
    %s11 = scalar_lea.sflag [#allocation3], 1
    %12 = vsyncpa %s11, 0
    %13 = vsyncpa [#allocation4], 0
    %s14 = scalar_lea.sflag [#allocation4], 1
    %15 = vsyncpa %s14, 0
    loop: start=0, step=1, limit=10
    $region2: #{tpu_custom_call.1} parent=1 // loop_pre_header
      _
    $region3: #{tpu_custom_call.1} parent=1 // loop_header
      %s17 = sphi 0, %s21
      %p18 = scmp.ge.s32.totalorder %s17, 10
      %s27 = sphi 0, %s29
      %s30 = sphi 0, %s27
      %s31 = sphi 0, %s30
      %s47 = sphi 0, %s31
      %s51 = sphi 0, %s51
      %s53 = sphi 0, %s51
      %s54 = sphi 0, %s53
      %s68 = sphi 0, %s54
      %s74 = sphi 0, %s76
      %s77 = sphi 0, %s74
      %s78 = sphi 0, %s77
      %s94 = sphi 0, %s78
      %s98 = sphi 0, %s98
      %s100 = sphi 0, %s98
      %s101 = sphi 0, %s100
      %s115 = sphi 0, %s101
      %s119 = sphi 0, %s119
      %s121 = sphi 0, %s119
      %s122 = sphi 0, %s121
      %s136 = sphi 0, %s122
    $region4: #{tpu_custom_call.1} parent=1 // loop_header_branch
      %20 = sbr.rel (%p18) target = $region8
    $region5: #{tpu_custom_call.1} parent=1 // loop_body
      %s22 = ssub.s32 %s17, 1
      %s23 = ssub.s32 %s17, 2
      %s24 = sadd.s32 %s17, 1
      %s25 = ssub.s32 %s17, %s24
      %p26 = scmp.eq.s32.totalorder %s25, 0
      %s28 = sadd.s32 %s27, 1
      %s29 = scalar_select %p26, %s27, %s28
      %p32 = pneg %p26
      %p33 = scmp.eq.s32.totalorder %s17, 7
      %p34 = por %p32, %p33
      %p35 = scmp.ne.s32.totalorder %s27, %s30
      %p36 = scmp.eq.s32.totalorder %s17, 0
      %p37 = por %p35, %p36
      %p38 = scmp.ne.s32.totalorder %s27, %s30
      %p39 = scmp.eq.s32.totalorder %s22, 7
      %p40 = por %p38, %p39
      %p41 = scmp.ne.s32.totalorder %s30, %s31
      %p42 = scmp.eq.s32.totalorder %s22, 0
      %p43 = por %p41, %p42
      %p44 = scmp.ne.s32.totalorder %s30, %s31
      %p45 = scmp.eq.s32.totalorder %s23, 7
      %p46 = por %p44, %p45
      %p48 = scmp.ne.s32.totalorder %s31, %s47
      %p49 = scmp.eq.s32.totalorder %s23, 0
      %p50 = por %p48, %p49
      %s52 = sadd.s32 %s51, 1
      %p55 = scmp.eq.s32.totalorder %s17, 7
      %p56 = scmp.ne.s32.totalorder %s51, %s53
      %p57 = scmp.eq.s32.totalorder %s17, 0
      %p58 = por %p56, %p57
      %p59 = scmp.ne.s32.totalorder %s51, %s53
      %p60 = scmp.eq.s32.totalorder %s22, 7
      %p61 = por %p59, %p60
      %p62 = scmp.ne.s32.totalorder %s53, %s54
      %p63 = scmp.eq.s32.totalorder %s22, 0
      %p64 = por %p62, %p63
      %p65 = scmp.ne.s32.totalorder %s53, %s54
      %p66 = scmp.eq.s32.totalorder %s23, 7
      %p67 = por %p65, %p66
      %p69 = scmp.ne.s32.totalorder %s54, %s68
      %p70 = scmp.eq.s32.totalorder %s23, 0
      %p71 = por %p69, %p70
      %s72 = ssub.s32 %s17, %s24
      %p73 = scmp.eq.s32.totalorder %s72, 0
      %s75 = sadd.s32 %s74, 1
      %s76 = scalar_select %p73, %s74, %s75
      %p79 = pneg %p73
      %p80 = scmp.eq.s32.totalorder %s17, 7
      %p81 = por %p79, %p80
      %p82 = scmp.ne.s32.totalorder %s74, %s77
      %p83 = scmp.eq.s32.totalorder %s17, 0
      %p84 = por %p82, %p83
      %p85 = scmp.ne.s32.totalorder %s74, %s77
      %p86 = scmp.eq.s32.totalorder %s22, 7
      %p87 = por %p85, %p86
      %p88 = scmp.ne.s32.totalorder %s77, %s78
      %p89 = scmp.eq.s32.totalorder %s22, 0
      %p90 = por %p88, %p89
      %p91 = scmp.ne.s32.totalorder %s77, %s78
      %p92 = scmp.eq.s32.totalorder %s23, 7
      %p93 = por %p91, %p92
      %p95 = scmp.ne.s32.totalorder %s78, %s94
      %p96 = scmp.eq.s32.totalorder %s23, 0
      %p97 = por %p95, %p96
      %s99 = sadd.s32 %s98, 1
      %p102 = scmp.eq.s32.totalorder %s17, 7
      %p103 = scmp.ne.s32.totalorder %s98, %s100
      %p104 = scmp.eq.s32.totalorder %s17, 0
      %p105 = por %p103, %p104
      %p106 = scmp.ne.s32.totalorder %s98, %s100
      %p107 = scmp.eq.s32.totalorder %s22, 7
      %p108 = por %p106, %p107
      %p109 = scmp.ne.s32.totalorder %s100, %s101
      %p110 = scmp.eq.s32.totalorder %s22, 0
      %p111 = por %p109, %p110
      %p112 = scmp.ne.s32.totalorder %s100, %s101
      %p113 = scmp.eq.s32.totalorder %s23, 7
      %p114 = por %p112, %p113
      %p116 = scmp.ne.s32.totalorder %s101, %s115
      %p117 = scmp.eq.s32.totalorder %s23, 0
      %p118 = por %p116, %p117
      %s120 = sadd.s32 %s119, 1
      %p123 = scmp.eq.s32.totalorder %s17, 7
      %p124 = scmp.ne.s32.totalorder %s119, %s121
      %p125 = scmp.eq.s32.totalorder %s17, 0
      %p126 = por %p124, %p125
      %p127 = scmp.ne.s32.totalorder %s119, %s121
      %p128 = scmp.eq.s32.totalorder %s22, 7
      %p129 = por %p127, %p128
      %p130 = scmp.ne.s32.totalorder %s121, %s122
      %p131 = scmp.eq.s32.totalorder %s22, 0
      %p132 = por %p130, %p131
      %p133 = scmp.ne.s32.totalorder %s121, %s122
      %p134 = scmp.eq.s32.totalorder %s23, 7
      %p135 = por %p133, %p134
      %p137 = scmp.ne.s32.totalorder %s122, %s136
      %p138 = scmp.eq.s32.totalorder %s23, 0
      %p139 = por %p137, %p138
      %p140 = scmp.le.s32.totalorder 1, %s17
      %p141 = scmp.lt.s32.totalorder %s17, 9
      %p142 = pnand %p140, %p141
      %p143 = pneg %p142
      // Predicated region
      $region9: #{tpu_custom_call.1} parent=5 // pred_check
        _
      $region10: #{tpu_custom_call.1} parent=5 // pred_check_branch
        %145 = sbr.rel (%p142) target = $region12
      $region11: #{tpu_custom_call.1} parent=5 // pred_region
        %s146 = ssub.s32 %s17, 1
        // Predicated region
        $region13: #{tpu_custom_call.1} parent=11 // pred_check
          %p147 = pneg %p64
        $region14: #{tpu_custom_call.1} parent=11 // pred_check_branch
          %149 = sbr.rel (%p147) target = $region16
        $region15: #{tpu_custom_call.1} parent=11 // pred_region
          _
        $region16: #{tpu_custom_call.1} parent=11 // pred_fallthru
          _
      $region12: #{tpu_custom_call.1} parent=5 // pred_fallthru
        _
      %p150 = scmp.lt.s32.totalorder %s17, 8
      // Predicated region
      $region17: #{tpu_custom_call.1} parent=5 // pred_check
        %p151 = pneg %p150
      $region18: #{tpu_custom_call.1} parent=5 // pred_check_branch
        %153 = sbr.rel (%p151) target = $region20
      $region19: #{tpu_custom_call.1} parent=5 // pred_region
        // Predicated region
        $region21: #{tpu_custom_call.1} parent=19 // pred_check
          %p154 = pneg %p37
        $region22: #{tpu_custom_call.1} parent=19 // pred_check_branch
          %156 = sbr.rel (%p154) target = $region24
        $region23: #{tpu_custom_call.1} parent=19 // pred_region
          %s157 = sand.u32 %s27, 1
          %s158 = scalar_lea.sflag [#allocation3], %s157
          %s159 = sand.u32 %s27, 1
          %s160 = smul.addr %s159, 8
          %s161 = scalar_lea.vmem [#allocation2], %s160
          %s163 = ssub.s32 128, 128
          %164 = vsyncadd %s158, %s163
          %s165 = smul.addr %s17, 128
          %s166 = scalar_lea.hbm %s0, %s165
          %s168 = sshll.u32 %s161, 4
          %s169 = int_to_ptr.vmem [resolvable:$true] %s168
          %171 = dma.hbm_to_vmem [thread:$0]  %s166, 128, %s169, %s158
        $region24: #{tpu_custom_call.1} parent=19 // pred_fallthru
          _
      $region20: #{tpu_custom_call.1} parent=5 // pred_fallthru
        _
      %p172 = scmp.le.s32.totalorder 1, %s17
      %p173 = scmp.lt.s32.totalorder %s17, 9
      %p174 = pnand %p172, %p173
      %p175 = pneg %p174
      // Predicated region
      $region25: #{tpu_custom_call.1} parent=5 // pred_check
        _
      $region26: #{tpu_custom_call.1} parent=5 // pred_check_branch
        %177 = sbr.rel (%p174) target = $region28
      $region27: #{tpu_custom_call.1} parent=5 // pred_region
        %s178 = ssub.s32 %s17, 1
        %s179 = sand.u32 %s30, 1
        %s180 = scalar_lea.sflag [#allocation3], %s179
        %s181 = sand.u32 %s30, 1
        %s182 = smul.addr %s181, 8
        %s183 = scalar_lea.vmem [#allocation2], %s182
        // Predicated region
        $region29: #{tpu_custom_call.1} parent=27 // pred_check
          %p184 = pneg %p43
        $region30: #{tpu_custom_call.1} parent=27 // pred_check_branch
          %186 = sbr.rel (%p184) target = $region32
        $region31: #{tpu_custom_call.1} parent=27 // pred_region
          %187 = dma.done %s180, 128
        $region32: #{tpu_custom_call.1} parent=27 // pred_fallthru
          _
        %s188 = sand.u32 %s30, 1
        %s189 = scalar_lea.sflag [#allocation3], %s188
        %s190 = sand.u32 %s30, 1
        %s191 = smul.addr %s190, 8
        %s192 = scalar_lea.vmem [#allocation2], %s191
        %p193 = pneg %p43
        %p194 = pneg %p40
        %p195 = pneg %p64
        %p196 = pneg %p61
        %p197 = pneg %p90
        %p198 = pneg %p87
        %s199 = sand.u32 %s77, 1
        %s200 = scalar_lea.sflag [#allocation4], %s199
        %s201 = sand.u32 %s77, 1
        %s202 = smul.addr %s201, 16
        %s203 = scalar_lea.vmem [#allocation5], %s202
        %p204 = pneg %p111
        %p205 = pneg %p108
        %p206 = pneg %p132
        %p207 = pneg %p129
        %v209 = vld [vmem:[%s183] sm:$0x7f]
        %v210 = vpack.c.bf16 %v209, %v209
        %v211 = vld [vmem:[%s1] sm:$0xf]
        %v212 = vld [vmem:[%s1 + $0x4] sm:$0xf]
        %v215 = vunpack.c.l.b16 %v211
        %v216 = vunpack.c.l.b16 %v212
        %v217 = vpack.c.b16 %v216, %v215
        %vm218 = vcmask 56320
        %v220 = vsel %vm218, %v217, 0
        %vm222 = vcmask 1042432
        %vm223 = vcmask 1043456
        %v224 = vsel %vm222, 4294967295, 65535
        %v225 = vsel %vm223, %v224, 0
        %v227 = vand.u32 %v210, %v225
        %229 = vmatprep.subr.bf16.mxu0 0
        %230 = vmatpush1.bf16.msra.mxu0 %v227
        %231 = vmatprep.subr.bf16.mxu0 0
        %232 = vmatpush1.bf16.msra.mxu0 0
        %233 = vmatprep.subr.bf16.mxu0 0
        %234 = vmatpush1.bf16.msra.mxu0 0
        %235 = vmatprep.subr.bf16.mxu0 0
        %236 = vmatpush1.bf16.msra.mxu0 0
        %237 = vmatprep.subr.bf16.mxu0 0
        %238 = vmatpush1.bf16.msra.mxu0 0
        %239 = vmatprep.subr.bf16.mxu0 0
        %240 = vmatpush1.bf16.msra.mxu0 0
        %241 = vmatprep.subr.bf16.mxu0 0
        %242 = vmatpush1.bf16.msra.mxu0 0
        %243 = vmatprep.subr.bf16.mxu0 0
        %244 = vmatpush1.bf16.msra.mxu0 0
        %245 = vmatprep.subr.bf16.mxu0 0
        %246 = vmatpush1.bf16.msra.mxu0 0
        %247 = vmatprep.subr.bf16.mxu0 0
        %248 = vmatpush1.bf16.msra.mxu0 0
        %249 = vmatprep.subr.bf16.mxu0 0
        %250 = vmatpush1.bf16.msra.mxu0 0
        %251 = vmatprep.subr.bf16.mxu0 0
        %252 = vmatpush1.bf16.msra.mxu0 0
        %253 = vmatprep.subr.bf16.mxu0 0
        %254 = vmatpush1.bf16.msra.mxu0 0
        %255 = vmatprep.subr.bf16.mxu0 0
        %256 = vmatpush1.bf16.msra.mxu0 0
        %257 = vmatprep.subr.bf16.mxu0 0
        %258 = vmatpush1.bf16.msra.mxu0 0
        %259 = vmatprep.subr.bf16.mxu0 0
        %260 = vmatpush1.bf16.msra.mxu0 0
        %261 = vmatprep.mubr.bf16.mxu0 0
        %262 = vmatmul.mubr.bf16.gmra.mrb[0].mxu0 %v220
        %v263 = vpop.f32.mrb[0].mxu0
        %v264 = vadd.f32 0.0, %v263
        %v265 = vpop.f32.mrb[0].mxu0
        %v266 = vpop.f32.mrb[0].mxu0
        %v267 = vadd.f32 0.0, %v266
        %v268 = vpop.f32.mrb[0].mxu0
        %269 = vdwg.mxu0
        %270 = vst [vmem:[%s203] sm:$0xff] %v264
        %271 = vst [vmem:[%s203 + $0x8] sm:$0xff] %v267
        %p272 = scmp.eq.s32.totalorder %s22, 0
        // Predicated region
        $region33: #{tpu_custom_call.1} parent=27 // pred_check
          %p273 = pneg %p272
        $region34: #{tpu_custom_call.1} parent=27 // pred_check_branch
          %275 = sbr.rel (%p273) target = $region36
        $region35: #{tpu_custom_call.1} parent=27 // pred_region
          %vm276 = vcmask 7168
          %277 = vst.msk [vmem:[%s3] sm:$0xff] %vm276, 0.0
          %278 = vst.msk [vmem:[%s3 + $0x8] sm:$0xff] %vm276, 0.0
          %279 = vst.msk [vmem:[%s4] sm:$0xff] %vm276, 0.0
          %280 = vst.msk [vmem:[%s4 + $0x8] sm:$0xff] %vm276, 0.0
        $region36: #{tpu_custom_call.1} parent=27 // pred_fallthru
          _
        %v281 = vld [vmem:[%s3] sm:$0xff]
        %v282 = vld [vmem:[%s3 + $0x8] sm:$0xff]
        %283 = vadd.xlane.f32.xlu0 %v264
        %v284 = vpop.xlane.xlu0 %283
        %285 = vadd.xlane.f32.xlu0 %v267
        %v286 = vpop.xlane.xlu0 %285
        %v287 = vadd.f32 %v281, %v284
        %v288 = vadd.f32 %v282, %v286
        %vm289 = vcmask 7168
        %290 = vst.msk [vmem:[%s3] sm:$0xff] %vm289, %v287
        %291 = vst.msk [vmem:[%s3 + $0x8] sm:$0xff] %vm289, %v288
        %v292 = vld [vmem:[%s4] sm:$0xff]
        %v293 = vld [vmem:[%s4 + $0x8] sm:$0xff]
        %v294 = vmul.f32 %v264, %v264
        %v295 = vmul.f32 %v267, %v267
        %296 = vadd.xlane.f32.xlu0 %v294
        %v297 = vpop.xlane.xlu0 %296
        %298 = vadd.xlane.f32.xlu0 %v295
        %v299 = vpop.xlane.xlu0 %298
        %v300 = vadd.f32 %v292, %v297
        %v301 = vadd.f32 %v293, %v299
        %302 = vst.msk [vmem:[%s4] sm:$0xff] %vm289, %v300
        %303 = vst.msk [vmem:[%s4 + $0x8] sm:$0xff] %vm289, %v301
        %s304 = sand.u32 %s77, 1
        %s305 = scalar_lea.sflag [#allocation4], %s304
        %s306 = sand.u32 %s77, 1
        %s307 = smul.addr %s306, 16
        %s308 = scalar_lea.vmem [#allocation5], %s307
        // Predicated region
        $region37: #{tpu_custom_call.1} parent=27 // pred_check
          %p309 = pneg %p87
        $region38: #{tpu_custom_call.1} parent=27 // pred_check_branch
          %311 = sbr.rel (%p309) target = $region40
        $region39: #{tpu_custom_call.1} parent=27 // pred_region
          %s313 = ssub.s32 256, 256
          %314 = vsyncadd %s305, %s313
          %s315 = smul.addr %s22, 128
          %s316 = scalar_lea.hbm %s2, %s315
          %s317 = sshll.u32 %s308, 4
          %s318 = int_to_ptr.vmem [resolvable:$true] %s317
          %323 = dma.vmem_to_hbm [thread:$0]  %s318, 256, %s316, %s305, 128, 1024, 8
        $region40: #{tpu_custom_call.1} parent=27 // pred_fallthru
          _
        // Predicated region
        $region41: #{tpu_custom_call.1} parent=27 // pred_check
          %p324 = pneg %p108
        $region42: #{tpu_custom_call.1} parent=27 // pred_check_branch
          %326 = sbr.rel (%p324) target = $region44
        $region43: #{tpu_custom_call.1} parent=27 // pred_region
          _
        $region44: #{tpu_custom_call.1} parent=27 // pred_fallthru
          _
        // Predicated region
        $region45: #{tpu_custom_call.1} parent=27 // pred_check
          %p327 = pneg %p129
        $region46: #{tpu_custom_call.1} parent=27 // pred_check_branch
          %329 = sbr.rel (%p327) target = $region48
        $region47: #{tpu_custom_call.1} parent=27 // pred_region
          _
        $region48: #{tpu_custom_call.1} parent=27 // pred_fallthru
          _
        // Predicated region
        $region49: #{tpu_custom_call.1} parent=27 // pred_check
          %p330 = pneg %p108
        $region50: #{tpu_custom_call.1} parent=27 // pred_check_branch
          %332 = sbr.rel (%p330) target = $region52
        $region51: #{tpu_custom_call.1} parent=27 // pred_region
          _
        $region52: #{tpu_custom_call.1} parent=27 // pred_fallthru
          _
        // Predicated region
        $region53: #{tpu_custom_call.1} parent=27 // pred_check
          %p333 = pneg %p129
        $region54: #{tpu_custom_call.1} parent=27 // pred_check_branch
          %335 = sbr.rel (%p333) target = $region56
        $region55: #{tpu_custom_call.1} parent=27 // pred_region
          _
        $region56: #{tpu_custom_call.1} parent=27 // pred_fallthru
          _
      $region28: #{tpu_custom_call.1} parent=5 // pred_fallthru
        _
      %p336 = scmp.le.s32.totalorder 2, %s17
      // Predicated region
      $region57: #{tpu_custom_call.1} parent=5 // pred_check
        %p337 = pneg %p336
      $region58: #{tpu_custom_call.1} parent=5 // pred_check_branch
        %339 = sbr.rel (%p337) target = $region60
      $region59: #{tpu_custom_call.1} parent=5 // pred_region
        %s340 = ssub.s32 %s17, 2
        // Predicated region
        $region61: #{tpu_custom_call.1} parent=59 // pred_check
          %p341 = pneg %p93
        $region62: #{tpu_custom_call.1} parent=59 // pred_check_branch
          %343 = sbr.rel (%p341) target = $region64
        $region63: #{tpu_custom_call.1} parent=59 // pred_region
          %s344 = sand.u32 %s78, 1
          %s345 = scalar_lea.sflag [#allocation4], %s344
          %s346 = sand.u32 %s78, 1
          %s347 = smul.addr %s346, 16
          %s348 = scalar_lea.vmem [#allocation5], %s347
          %349 = dma.done %s345, 256
        $region64: #{tpu_custom_call.1} parent=59 // pred_fallthru
          _
      $region60: #{tpu_custom_call.1} parent=5 // pred_fallthru
        _
    $region6: #{tpu_custom_call.1} parent=1 // loop_footer
      %s21 = sadd.s32 1, %s17
    $region7: #{tpu_custom_call.1} parent=1 // loop_footer_branch
      %16 = sbr.rel target = $region3
    $region8: #{tpu_custom_call.1} parent=1 // loop_exit
      _
    %350 = vsyncpa [#allocation3], 1
    %s351 = scalar_lea.sflag [#allocation3], 1
    %352 = vsyncpa %s351, 1
    %353 = vsyncpa [#allocation4], 1
    %s354 = scalar_lea.sflag [#allocation4], 1
    %355 = vsyncpa %s354, 1

</llo_original>
